<compile_context>
chip_gen: v5e
topology: v5e:2x2
jax: 0.10.0
libtpu: 0.0.40
codegen_flags: <defaults>
</compile_context>

<pallas_src>
import jax
import jax.numpy as jnp
from jax.experimental import pallas as pl
from jax.experimental.pallas import tpu as pltpu

PI = 3.14159  # match the torch.jit.script constant exactly
A = (2.0 * PI) ** 0.5
INV_A = 1.0 / A


def gaussian_kernel(t_ref, mean_ref, std_ref, o_ref):
    # t_ref:              (TM, 1) float32   (already mul*x + bias)
    # mean_ref/std_ref:   (1, K)  float32
    # o_ref:              (TM, K) out dtype
    # Hoisted per-tile (1,K) vector math: one exact reciprocal, two scales.
    std = jnp.abs(std_ref[...]) + 1e-5                      # (1, K)
    inv_std = pl.reciprocal(std, approx=False)              # (1, K)
    coeff = inv_std * INV_A                                 # (1, K)
    neg_half_inv_var = inv_std * inv_std * (-0.5)           # (1, K)

    d = t_ref[...] - mean_ref[...]                          # (TM, K)
    o_ref[...] = (jnp.exp(d * d * neg_half_inv_var) * coeff).astype(o_ref.dtype)


def gaussian_layer_forward(x, edge_type, means_w, stds_w, mul_w, bias_w,
                           *, tm=8192, out_dtype=jnp.float32):
    """x: [B, N, N] float, edge_type: [B, N, N] int.
    means_w/stds_w: [1, K]; mul_w/bias_w: [edge_types, 1].
    Returns [B, N, N, K] `out_dtype` (float32 matches the PyTorch module)."""
    B, N1, N2 = x.shape
    K = means_w.shape[1]
    M = B * N1 * N2

    # Wrapper glue: embedding gathers fused with the affine transform, so the
    # kernel consumes a single per-row scalar stream t = mul*x + bias.
    et = edge_type.reshape(M)
    mul = jnp.take(mul_w[:, 0], et, axis=0).astype(jnp.float32)
    bias = jnp.take(bias_w[:, 0], et, axis=0).astype(jnp.float32)
    t = (mul * x.reshape(M).astype(jnp.float32) + bias).reshape(M, 1)

    mean = means_w.astype(jnp.float32).reshape(1, K)
    std = stds_w.astype(jnp.float32).reshape(1, K)

    # Row tile: multiple of 8 sublanes; shrink for tiny inputs. No padding —
    # Pallas clips the ragged last block on store.
    tm_eff = max(8, min(tm, pl.cdiv(M, 8) * 8))
    grid = pl.cdiv(M, tm_eff)

    out_itemsize = jnp.dtype(out_dtype).itemsize
    # VMEM budget: (tm,1) f32 input block lane-pads to 512 B/row; both the
    # input and the output tile are double-buffered. Add headroom for params.
    vmem_bytes = 2 * (tm_eff * 512) + 2 * (tm_eff * K * out_itemsize)
    vmem_limit = min(vmem_bytes + (8 << 20), 48 << 20)

    cost = pl.CostEstimate(
        flops=5 * M * K,
        transcendentals=M * K,
        bytes_accessed=M * K * out_itemsize + M * 4 + 2 * K * 4,
    )

    out = pl.pallas_call(
        gaussian_kernel,
        out_shape=jax.ShapeDtypeStruct((M, K), out_dtype),
        grid_spec=pltpu.PrefetchScalarGridSpec(
            num_scalar_prefetch=0,
            grid=(grid,),
            in_specs=[
                pl.BlockSpec((tm_eff, 1), lambda i: (i, 0)),   # t = mul*x + bias
                pl.BlockSpec((1, K), lambda i: (0, 0)),        # means (resident)
                pl.BlockSpec((1, K), lambda i: (0, 0)),        # stds  (resident)
            ],
            out_specs=pl.BlockSpec((tm_eff, K), lambda i: (i, 0)),
        ),
        compiler_params=pltpu.CompilerParams(
            dimension_semantics=("parallel",),   # shards the 1-D grid across v7x's 2 TCs
            vmem_limit_bytes=vmem_limit),
        cost_estimate=cost,
    )(t, mean, std)

    return out.reshape(B, N1, N2, K)


def gaussian_layer_reference(x, edge_type, means_w, stds_w, mul_w, bias_w):
    """Pure-JAX reference mirroring the PyTorch forward."""
    K = means_w.shape[1]
    mul = jnp.take(mul_w, edge_type, axis=0).astype(x.dtype)     # [B,N,N,1]
    bias = jnp.take(bias_w, edge_type, axis=0).astype(x.dtype)   # [B,N,N,1]
    t = mul * x[..., None] + bias                                 # [B,N,N,1]
    t = jnp.broadcast_to(t, t.shape[:-1] + (K,)).astype(jnp.float32)
    mean = means_w.astype(jnp.float32).reshape(-1)
    std = jnp.abs(stds_w.astype(jnp.float32).reshape(-1)) + 1e-5
    return jnp.exp(-0.5 * ((t - mean) / std) ** 2) / (A * std)


if __name__ == "__main__":
    K = 128
    edge_types = 1024
    B, N = 2, 8

    key = jax.random.PRNGKey(0)
    k_means, k_stds, k_x, k_et = jax.random.split(key, 4)

    # Parameter init matching nn.init in __init__
    means_w = jax.random.uniform(k_means, (1, K), jnp.float32, 0.0, 3.0)
    stds_w = jax.random.uniform(k_stds, (1, K), jnp.float32, 0.0, 3.0)
    mul_w = jnp.ones((edge_types, 1), jnp.float32)    # constant 1
    bias_w = jnp.zeros((edge_types, 1), jnp.float32)  # constant 0

    # Example inputs
    x = jax.random.uniform(k_x, (B, N, N), jnp.float32, 0.0, 5.0)
    edge_type = jax.random.randint(k_et, (B, N, N), 0, edge_types, jnp.int32)

    out = gaussian_layer_forward(x, edge_type, means_w, stds_w, mul_w, bias_w)
    out = jax.block_until_ready(out)

    ref = gaussian_layer_reference(x, edge_type, means_w, stds_w, mul_w, bias_w)
    assert out.shape == (B, N, N, K)
    assert jnp.allclose(out, ref, atol=1e-5, rtol=1e-5), "mismatch vs reference"

    print("KERNEL_OK")
</pallas_src>

<mosaic_0001>
module attributes {stable_mosaic.version = 11 : i64} {
  func.func @gaussian_kernel(%arg0: i32, %arg1: memref<128x1xf32, #tpu.memory_space<vmem>>, %arg2: memref<1x128xf32, #tpu.memory_space<vmem>>, %arg3: memref<1x128xf32, #tpu.memory_space<vmem>>, %arg4: memref<128x128xf32, #tpu.memory_space<vmem>>) attributes {dimension_semantics = [#tpu.dimension_semantics<parallel>], iteration_bounds = array<i64: 1>, scalar_prefetch = 0 : i64, scratch_operands = 0 : i64, tpu.core_type = #tpu.core_type<tc>, window_params = [{transform_indices = @transform_0, window_bounds = array<i64: 128, 1>}, {pipeline_mode = #tpu.pipeline_mode<synchronous>, transform_indices = @transform_1, window_bounds = array<i64: 1, 128>}, {pipeline_mode = #tpu.pipeline_mode<synchronous>, transform_indices = @transform_2, window_bounds = array<i64: 1, 128>}, {transform_indices = @transform_3, window_bounds = array<i64: 128, 128>}]} {
    %c0 = arith.constant 0 : index
    %c0_0 = arith.constant 0 : index
    %0 = vector.load %arg3[%c0, %c0_0] : memref<1x128xf32, #tpu.memory_space<vmem>>, vector<1x128xf32>
    %1 = math.absf %0 : vector<1x128xf32>
    %cst = arith.constant 9.99999974E-6 : f32
    %2 = vector.broadcast %cst : f32 to vector<1x128xf32>
    %3 = arith.addf %1, %2 : vector<1x128xf32>
    %4 = tpu.reciprocal %3 : vector<1x128xf32> -> vector<1x128xf32>
    %cst_1 = arith.constant 0.398942441 : f32
    %5 = vector.broadcast %cst_1 : f32 to vector<1x128xf32>
    %6 = arith.mulf %4, %5 : vector<1x128xf32>
    %7 = arith.mulf %4, %4 : vector<1x128xf32>
    %cst_2 = arith.constant -5.000000e-01 : f32
    %8 = vector.broadcast %cst_2 : f32 to vector<1x128xf32>
    %9 = arith.mulf %7, %8 : vector<1x128xf32>
    %c0_3 = arith.constant 0 : index
    %c0_4 = arith.constant 0 : index
    %10 = vector.load %arg1[%c0_3, %c0_4] : memref<128x1xf32, #tpu.memory_space<vmem>>, vector<128x1xf32>
    %c0_5 = arith.constant 0 : index
    %c0_6 = arith.constant 0 : index
    %11 = vector.load %arg2[%c0_5, %c0_6] : memref<1x128xf32, #tpu.memory_space<vmem>>, vector<1x128xf32>
    %12 = vector.broadcast %10 : vector<128x1xf32> to vector<128x128xf32>
    %13 = vector.broadcast %11 : vector<1x128xf32> to vector<128x128xf32>
    %14 = arith.subf %12, %13 : vector<128x128xf32>
    %15 = arith.mulf %14, %14 : vector<128x128xf32>
    %16 = vector.broadcast %9 : vector<1x128xf32> to vector<128x128xf32>
    %17 = arith.mulf %15, %16 : vector<128x128xf32>
    %18 = math.exp %17 : vector<128x128xf32>
    %19 = vector.broadcast %6 : vector<1x128xf32> to vector<128x128xf32>
    %20 = arith.mulf %18, %19 : vector<128x128xf32>
    %c0_7 = arith.constant 0 : index
    %c0_8 = arith.constant 0 : index
    %21 = vector.load %arg4[%c0_7, %c0_8] : memref<128x128xf32, #tpu.memory_space<vmem>>, vector<128x128xf32>
    tpu.vector_store %arg4[%c0_7, %c0_8], %20 {strides = array<i32>} : memref<128x128xf32, #tpu.memory_space<vmem>>, vector<128x128xf32>,
    return
  }
  func.func @transform_0(%arg0: i32) -> (i32, i32) {
    %c0_i32 = arith.constant 0 : i32
    %c0_i32_0 = arith.constant 0 : i32
    return %arg0, %c0_i32 : i32, i32
  }
  func.func @transform_1(%arg0: i32) -> (i32, i32) {
    %c0_i32 = arith.constant 0 : i32
    %c0_i32_0 = arith.constant 0 : i32
    %c0_i32_1 = arith.constant 0 : i32
    return %c0_i32, %c0_i32_0 : i32, i32
  }
  func.func @transform_2(%arg0: i32) -> (i32, i32) {
    %c0_i32 = arith.constant 0 : i32
    %c0_i32_0 = arith.constant 0 : i32
    %c0_i32_1 = arith.constant 0 : i32
    return %c0_i32, %c0_i32_0 : i32, i32
  }
  func.func @transform_3(%arg0: i32) -> (i32, i32) {
    %c0_i32 = arith.constant 0 : i32
    %c0_i32_0 = arith.constant 0 : i32
    return %arg0, %c0_i32 : i32, i32
  }
}

</mosaic_0001>

<llo_original>
// kernel: tpu_custom_call.1
$region0: #{tpu_custom_call.1}
  #allocation0 [shape = 'u32[]', space=smem, size = 0x4, offset = 0x4, fixed_abs, tag = 'smem constant byte address 0x4 - core index']
  #allocation1 [shape = 'u32[72,128]{1,0:T(1,128)}', space=vmem, size = 0x9000, scoped, tag = 'internal scratch']
  %s0 = inlined_call_operand.vmem [shape: f32[128,1], index: 0, kind: input, shape index: {}]
  %s1 = inlined_call_operand.vmem [shape: f32[1,128], index: 1, kind: input, shape index: {}]
  %s2 = inlined_call_operand.vmem [shape: f32[1,128], index: 2, kind: input, shape index: {}]
  %s3 = inlined_call_operand.hbm [shape: f32[128,128], index: 3, kind: output, shape index: {}]
  %s4 = sld [smem:[#allocation0]]
  $region22: #{tpu_custom_call.1} parent=0
    _
  %s6 = ssub.s32 1, %s4
  %s7 = scalar_select 0, %s6, %s4
  $region1: #{tpu_custom_call.1} parent=0
    #allocation2 [shape = 'u8[65536]{0}', space=vmem, size = 0x10000, scoped, tag = 'output window, operand 0, single buffered']
    #allocation3 [shape = 's32[1]{0}', space=sflag, size = 0x4, scoped, tag = 'scoped memory for tpu_custom_call.1']
    %8 = vsyncpa [#allocation3], 0
    // Predicated region
    $region2: #{tpu_custom_call.1} parent=1 // pred_check
      _
    $region3: #{tpu_custom_call.1} parent=1 // pred_check_branch
      %10 = sbr.rel (0) target = $region5
    $region4: #{tpu_custom_call.1} parent=1 // pred_region
      _
    $region5: #{tpu_custom_call.1} parent=1 // pred_fallthru
      _
    // Predicated region
    $region6: #{tpu_custom_call.1} parent=1 // pred_check
      _
    $region7: #{tpu_custom_call.1} parent=1 // pred_check_branch
      %12 = sbr.rel (0) target = $region9
    $region8: #{tpu_custom_call.1} parent=1 // pred_region
      _
    $region9: #{tpu_custom_call.1} parent=1 // pred_fallthru
      _
    // Predicated region
    $region10: #{tpu_custom_call.1} parent=1 // pred_check
      _
    $region11: #{tpu_custom_call.1} parent=1 // pred_check_branch
      %14 = sbr.rel (0) target = $region13
    $region12: #{tpu_custom_call.1} parent=1 // pred_region
      _
    $region13: #{tpu_custom_call.1} parent=1 // pred_fallthru
      _
    %v15 = vld [vmem:[%s2] sm:$0x1]
    %v16 = vand.u32 2147483647, %v15
    %v17 = vadd.f32 %v16, 1e-05
    %v18 = vrcp.pop %v17
    %v19 = vmul.f32 %v17, %v18
    %v20 = vsub.f32 1.0, %v19
    %v21 = vmul.f32 %v18, %v20
    %v22 = vadd.f32 %v18, %v21
    %vm23 = vweird.f32 %v17
    %vm24 = vweird.f32 %v18
    %vm25 = vmor %vm23, %vm24
    %v26 = vsel %vm25, %v18, %v22
    %v27 = vand.u32 2147483647, %v17
    %vm28 = vcmp.eq.f32.partialorder %v27, 8.507059e+37
    %v29 = vand.u32 %v17, 2147483648
    %v30 = vor.u32 1.1754944e-38, %v29
    %v31 = vsel %vm28, %v30, %v26
    %v32 = vmul.f32 %v31, 0.39894244
    %v33 = vmul.f32 %v31, %v31
    %v34 = vmul.f32 %v33, -0.5
    %v35 = vld [vmem:[%s0] sm:$0xff]
    %v36 = vld [vmem:[%s0 + $0x8] sm:$0xff]
    %v37 = vld [vmem:[%s0 + $0x10] sm:$0xff]
    %v38 = vld [vmem:[%s0 + $0x18] sm:$0xff]
    %v39 = vld [vmem:[%s0 + $0x20] sm:$0xff]
    %v40 = vld [vmem:[%s0 + $0x28] sm:$0xff]
    %v41 = vld [vmem:[%s0 + $0x30] sm:$0xff]
    %v42 = vld [vmem:[%s0 + $0x38] sm:$0xff]
    %v43 = vld [vmem:[%s0 + $0x40] sm:$0xff]
    %v44 = vld [vmem:[%s0 + $0x48] sm:$0xff]
    %v45 = vld [vmem:[%s0 + $0x50] sm:$0xff]
    %v46 = vld [vmem:[%s0 + $0x58] sm:$0xff]
    %v47 = vld [vmem:[%s0 + $0x60] sm:$0xff]
    %v48 = vld [vmem:[%s0 + $0x68] sm:$0xff]
    %v49 = vld [vmem:[%s0 + $0x70] sm:$0xff]
    %v50 = vld [vmem:[%s0 + $0x78] sm:$0xff]
    %v51 = vld [vmem:[%s1] sm:$0x1]
    %53 = vset.pattern.permute.xlu0 0
    %54 = vperm.xlu0 %53, %v35
    %v55 = vpop.permute.xlu0 %54
    %58 = vset.pattern.permute.xlu0 0
    %59 = vperm.xlu0 %58, %v36
    %v60 = vpop.permute.xlu0 %59
    %63 = vset.pattern.permute.xlu0 0
    %64 = vperm.xlu0 %63, %v37
    %v65 = vpop.permute.xlu0 %64
    %68 = vset.pattern.permute.xlu0 0
    %69 = vperm.xlu0 %68, %v38
    %v70 = vpop.permute.xlu0 %69
    %73 = vset.pattern.permute.xlu0 0
    %74 = vperm.xlu0 %73, %v39
    %v75 = vpop.permute.xlu0 %74
    %78 = vset.pattern.permute.xlu0 0
    %79 = vperm.xlu0 %78, %v40
    %v80 = vpop.permute.xlu0 %79
    %83 = vset.pattern.permute.xlu0 0
    %84 = vperm.xlu0 %83, %v41
    %v85 = vpop.permute.xlu0 %84
    %88 = vset.pattern.permute.xlu0 0
    %89 = vperm.xlu0 %88, %v42
    %v90 = vpop.permute.xlu0 %89
    %93 = vset.pattern.permute.xlu0 0
    %94 = vperm.xlu0 %93, %v43
    %v95 = vpop.permute.xlu0 %94
    %98 = vset.pattern.permute.xlu0 0
    %99 = vperm.xlu0 %98, %v44
    %v100 = vpop.permute.xlu0 %99
    %103 = vset.pattern.permute.xlu0 0
    %104 = vperm.xlu0 %103, %v45
    %v105 = vpop.permute.xlu0 %104
    %108 = vset.pattern.permute.xlu0 0
    %109 = vperm.xlu0 %108, %v46
    %v110 = vpop.permute.xlu0 %109
    %113 = vset.pattern.permute.xlu0 0
    %114 = vperm.xlu0 %113, %v47
    %v115 = vpop.permute.xlu0 %114
    %118 = vset.pattern.permute.xlu0 0
    %119 = vperm.xlu0 %118, %v48
    %v120 = vpop.permute.xlu0 %119
    %123 = vset.pattern.permute.xlu0 0
    %124 = vperm.xlu0 %123, %v49
    %v125 = vpop.permute.xlu0 %124
    %128 = vset.pattern.permute.xlu0 0
    %129 = vperm.xlu0 %128, %v50
    %v130 = vpop.permute.xlu0 %129
    %v133 = vperm.slane %v51, 0
    %v135 = vsub.f32 %v55, %v133
    %v136 = vsub.f32 %v60, %v133
    %v137 = vsub.f32 %v65, %v133
    %v138 = vsub.f32 %v70, %v133
    %v139 = vsub.f32 %v75, %v133
    %v140 = vsub.f32 %v80, %v133
    %v141 = vsub.f32 %v85, %v133
    %v142 = vsub.f32 %v90, %v133
    %v143 = vsub.f32 %v95, %v133
    %v144 = vsub.f32 %v100, %v133
    %v145 = vsub.f32 %v105, %v133
    %v146 = vsub.f32 %v110, %v133
    %v147 = vsub.f32 %v115, %v133
    %v148 = vsub.f32 %v120, %v133
    %v149 = vsub.f32 %v125, %v133
    %v150 = vsub.f32 %v130, %v133
    %v151 = vmul.f32 %v135, %v135
    %v152 = vmul.f32 %v136, %v136
    %v153 = vmul.f32 %v137, %v137
    %v154 = vmul.f32 %v138, %v138
    %v155 = vmul.f32 %v139, %v139
    %v156 = vmul.f32 %v140, %v140
    %v157 = vmul.f32 %v141, %v141
    %v158 = vmul.f32 %v142, %v142
    %v159 = vmul.f32 %v143, %v143
    %v160 = vmul.f32 %v144, %v144
    %v161 = vmul.f32 %v145, %v145
    %v162 = vmul.f32 %v146, %v146
    %v163 = vmul.f32 %v147, %v147
    %v164 = vmul.f32 %v148, %v148
    %v165 = vmul.f32 %v149, %v149
    %v166 = vmul.f32 %v150, %v150
    %v168 = vperm.slane %v34, 0
    %v170 = vmul.f32 %v151, %v168
    %v171 = vmul.f32 %v152, %v168
    %v172 = vmul.f32 %v153, %v168
    %v173 = vmul.f32 %v154, %v168
    %v174 = vmul.f32 %v155, %v168
    %v175 = vmul.f32 %v156, %v168
    %v176 = vmul.f32 %v157, %v168
    %v177 = vmul.f32 %v158, %v168
    %v178 = vmul.f32 %v159, %v168
    %v179 = vmul.f32 %v160, %v168
    %v180 = vmul.f32 %v161, %v168
    %v181 = vmul.f32 %v162, %v168
    %v182 = vmul.f32 %v163, %v168
    %v183 = vmul.f32 %v164, %v168
    %v184 = vmul.f32 %v165, %v168
    %v185 = vmul.f32 %v166, %v168
    %v186 = vmul.f32 %v170, 1.442695
    %v187 = vpow.pop %v186
    %v188 = vmul.f32 %v171, 1.442695
    %v189 = vpow.pop %v188
    %v190 = vmul.f32 %v172, 1.442695
    %v191 = vpow.pop %v190
    %v192 = vmul.f32 %v173, 1.442695
    %v193 = vpow.pop %v192
    %v194 = vmul.f32 %v174, 1.442695
    %v195 = vpow.pop %v194
    %v196 = vmul.f32 %v175, 1.442695
    %v197 = vpow.pop %v196
    %v198 = vmul.f32 %v176, 1.442695
    %v199 = vpow.pop %v198
    %v200 = vmul.f32 %v177, 1.442695
    %v201 = vpow.pop %v200
    %v202 = vmul.f32 %v178, 1.442695
    %v203 = vpow.pop %v202
    %v204 = vmul.f32 %v179, 1.442695
    %v205 = vpow.pop %v204
    %v206 = vmul.f32 %v180, 1.442695
    %v207 = vpow.pop %v206
    %v208 = vmul.f32 %v181, 1.442695
    %v209 = vpow.pop %v208
    %v210 = vmul.f32 %v182, 1.442695
    %v211 = vpow.pop %v210
    %v212 = vmul.f32 %v183, 1.442695
    %v213 = vpow.pop %v212
    %v214 = vmul.f32 %v184, 1.442695
    %v215 = vpow.pop %v214
    %v216 = vmul.f32 %v185, 1.442695
    %v217 = vpow.pop %v216
    %v219 = vperm.slane %v32, 0
    %v221 = vmul.f32 %v187, %v219
    %v222 = vmul.f32 %v189, %v219
    %v223 = vmul.f32 %v191, %v219
    %v224 = vmul.f32 %v193, %v219
    %v225 = vmul.f32 %v195, %v219
    %v226 = vmul.f32 %v197, %v219
    %v227 = vmul.f32 %v199, %v219
    %v228 = vmul.f32 %v201, %v219
    %v229 = vmul.f32 %v203, %v219
    %v230 = vmul.f32 %v205, %v219
    %v231 = vmul.f32 %v207, %v219
    %v232 = vmul.f32 %v209, %v219
    %v233 = vmul.f32 %v211, %v219
    %v234 = vmul.f32 %v213, %v219
    %v235 = vmul.f32 %v215, %v219
    %v236 = vmul.f32 %v217, %v219
    %237 = vst [vmem:[#allocation2] sm:$0xff] %v221
    %238 = vst [vmem:[#allocation2 + $0x8] sm:$0xff] %v222
    %239 = vst [vmem:[#allocation2 + $0x10] sm:$0xff] %v223
    %240 = vst [vmem:[#allocation2 + $0x18] sm:$0xff] %v224
    %241 = vst [vmem:[#allocation2 + $0x20] sm:$0xff] %v225
    %242 = vst [vmem:[#allocation2 + $0x28] sm:$0xff] %v226
    %243 = vst [vmem:[#allocation2 + $0x30] sm:$0xff] %v227
    %244 = vst [vmem:[#allocation2 + $0x38] sm:$0xff] %v228
    %245 = vst [vmem:[#allocation2 + $0x40] sm:$0xff] %v229
    %246 = vst [vmem:[#allocation2 + $0x48] sm:$0xff] %v230
    %247 = vst [vmem:[#allocation2 + $0x50] sm:$0xff] %v231
    %248 = vst [vmem:[#allocation2 + $0x58] sm:$0xff] %v232
    %249 = vst [vmem:[#allocation2 + $0x60] sm:$0xff] %v233
    %250 = vst [vmem:[#allocation2 + $0x68] sm:$0xff] %v234
    %251 = vst [vmem:[#allocation2 + $0x70] sm:$0xff] %v235
    %252 = vst [vmem:[#allocation2 + $0x78] sm:$0xff] %v236
    // Predicated region
    $region14: #{tpu_custom_call.1} parent=1 // pred_check
      _
    $region15: #{tpu_custom_call.1} parent=1 // pred_check_branch
      %254 = sbr.rel (0) target = $region17
    $region16: #{tpu_custom_call.1} parent=1 // pred_region
      %256 = vsyncadd [#allocation3], 0
      %s257 = sshll.u32 [#allocation2], 4
      %s258 = int_to_ptr.vmem [resolvable:$true] %s257
      %s259 = sshll.u32 %s3, 4
      %s260 = int_to_ptr.hbm [resolvable:$true] %s259
      %265 = dma.vmem_to_hbm [thread:$0]  %s258, 2048, %s260, [#allocation3], 128, 128, 8
    $region17: #{tpu_custom_call.1} parent=1 // pred_fallthru
      _
    // Predicated region
    $region18: #{tpu_custom_call.1} parent=1 // pred_check
      _
    $region19: #{tpu_custom_call.1} parent=1 // pred_check_branch
      %267 = sbr.rel (0) target = $region21
    $region20: #{tpu_custom_call.1} parent=1 // pred_region
      %269 = dma.done [#allocation3], 2048
    $region21: #{tpu_custom_call.1} parent=1 // pred_fallthru
      _
    %270 = vsyncpa [#allocation3], 1

</llo_original>
